<compile_context>
chip_gen: v6e
topology: v6e:2x2x1
jax: 0.10.0
libtpu: 0.0.40
codegen_flags: <defaults>
</compile_context>

<pallas_src>
import functools

import jax
import jax.numpy as jnp
from jax import lax
from jax.experimental import pallas as pl
from jax.experimental.pallas import tpu as pltpu

# Architecture constants fixed by the PyTorch module.
_KH1 = _KW1 = 8   # conv1 kernel
_ST1 = 4          # conv1 stride
_KH2 = _KW2 = 2   # conv2 kernel
_ST2 = 2          # conv2 stride
_KK2 = _KH2 * _KW2   # = 4 conv2 kernel positions
_C1 = 32          # conv1 out channels
_C2 = 64          # conv2 out channels
_KDIM = 128       # kinematics MLP width


# ----------------------------------------------------------------------------
# Fused kernel: whole forward for one batch block.
#   p1   : [kk2, s2, B_blk, K1]  bf16   conv1 im2col patches (rows (s, b))
#   w1   : [K1, 32]              bf16
#   w2p  : [128, 64]             bf16   conv2 weight, rows (kernel-pos, cin)
#   wfl  : [s2*64, F]            bf16   final-layer lidar weight, rows (s, c)
#   kin  : [B_blk, kin_dim]      bf16
#   wk1  : [kin_dim, 128]        bf16
#   wk23 : [2, 128, 128]         bf16
#   wfk  : [128, F]              bf16   final-layer kinematics weight
#   bias : [6, max(F,128)]       f32    packed biases (b1 tiled x4, b2, bk1..3, bf)
#   out  : [B_blk, F]            f32
# ----------------------------------------------------------------------------
def _fused_kernel(p1_ref, w1_ref, w2_ref, wfl_ref, kin_ref, wk1_ref, wk23_ref,
                  wfk_ref, bias_ref, out_ref, y1_ref, y2_ref, acc_ref,
                  *, kk2, s2, bblk, c1, c2):
    f32 = jnp.float32
    cdt = w2_ref.dtype                       # compute (MXU input) dtype, bf16
    m2 = s2 * bblk
    k1 = w1_ref.shape[0]
    feat = out_ref.shape[1]
    relu = lambda v: jnp.maximum(v, 0.0)

    # --- conv1: one matmul per conv2 kernel position, packed along lanes -----
    w1 = w1_ref[...]
    for p in range(kk2):
        lhs = p1_ref[p].reshape(m2, k1)      # rows (s, b); leading-dim merge only
        y1_ref[:, p * c1:(p + 1) * c1] = jnp.dot(
            lhs, w1, preferred_element_type=f32)

    # --- conv1 bias+ReLU on packed 128-lane vregs; conv2 = one K=128 matmul --
    b1t = bias_ref[0:1, 0:kk2 * c1]          # b_c1 tiled kk2 times
    b2 = bias_ref[1:2, 0:c2]
    y1 = relu(y1_ref[...] + b1t).astype(cdt)                       # [m2, 128]
    y2_ref[...] = relu(
        jnp.dot(y1, w2_ref[...], preferred_element_type=f32) + b2
    ).astype(y2_ref.dtype)                                         # [m2, 64]

    # --- kinematics MLP: 3x (Linear + ReLU), vreg/VMEM resident --------------
    bk1 = bias_ref[2:3, 0:_KDIM]
    bk2 = bias_ref[3:4, 0:_KDIM]
    bk3 = bias_ref[4:5, 0:_KDIM]
    k = relu(jnp.dot(kin_ref[...], wk1_ref[...], preferred_element_type=f32) + bk1)
    k = relu(jnp.dot(k.astype(cdt), wk23_ref[0], preferred_element_type=f32) + bk2)
    k = relu(jnp.dot(k.astype(cdt), wk23_ref[1], preferred_element_type=f32) + bk3)

    # --- final layer: concat == sum of two matmul contributions --------------
    bf = bias_ref[5:6, 0:feat]
    acc_ref[...] = jnp.dot(k.astype(cdt), wfk_ref[...],
                           preferred_element_type=f32) + bf         # [B_blk, F]

    def lidar_step(s, carry):
        i = pl.multiple_of(s * bblk, 8)
        j = pl.multiple_of(s * c2, 8)
        acc_ref[...] += jnp.dot(y2_ref[pl.ds(i, bblk), :],
                                wfl_ref[pl.ds(j, c2), :],
                                preferred_element_type=f32)
        return carry
    lax.fori_loop(0, s2, lidar_step, 0, unroll=(s2 <= 4))

    out_ref[...] = relu(acc_ref[...]).astype(out_ref.dtype)


# ----------------------------------------------------------------------------
# XLA prologue: im2col for conv1, laid out [kk2, s2, B_pad, K1] so that every
# conv2 kernel position p is a contiguous slab whose rows are (s2, batch),
# batch padded to a multiple of 8 (all in-kernel slices stay tile aligned).
# Only conv1 positions actually consumed by conv2 are produced.
# ----------------------------------------------------------------------------
def _conv1_patches(x, b_pad, dtype):
    B, C, H, W = x.shape
    OH1 = (H - _KH1) // _ST1 + 1
    OW1 = (W - _KW1) // _ST1 + 1
    OH2 = (OH1 - _KH2) // _ST2 + 1
    OW2 = (OW1 - _KW2) // _ST2 + 1
    cols = []
    for i in range(_KH1):
        for j in range(_KW1):
            cols.append(x[:, :, i:i + _ST1 * OH1:_ST1, j:j + _ST1 * OW1:_ST1])
    p = jnp.stack(cols, axis=2)                       # [B, C, kh*kw, OH1, OW1]
    p = p.reshape(B, C * _KH1 * _KW1, OH1, OW1)       # feat idx = c*(kh*kw)+i*kw+j
    slabs = []
    for di in range(_KH2):
        for dj in range(_KW2):
            sel = p[:, :, di:di + _ST2 * OH2:_ST2, dj:dj + _ST2 * OW2:_ST2]
            sel = sel.reshape(B, C * _KH1 * _KW1, OH2 * OW2).transpose(2, 0, 1)
            slabs.append(sel)                         # [s2, B, K1]
    patches = jnp.stack(slabs, axis=0)                # [kk2, s2, B, K1]
    if b_pad > B:
        patches = jnp.pad(patches, ((0, 0), (0, 0), (0, b_pad - B), (0, 0)))
    return patches.astype(dtype), OH2, OW2


# ----------------------------------------------------------------------------
# Deterministic parameter init (PyTorch-style uniform(-1/sqrt(fan_in), +)).
# ----------------------------------------------------------------------------
def _uniform(key, shape, fan_in):
    bound = 1.0 / jnp.sqrt(jnp.float32(fan_in))
    return jax.random.uniform(key, shape, jnp.float32, -bound, bound)


def init_params(key, lidar_shape, kin_dim, features_dim=256):
    C, H, W = lidar_shape
    ks = jax.random.split(key, 12)
    p = {}
    p["w_c1"] = _uniform(ks[0], (_C1, C, _KH1, _KW1), C * _KH1 * _KW1)
    p["b_c1"] = _uniform(ks[1], (_C1,), C * _KH1 * _KW1)
    p["w_c2"] = _uniform(ks[2], (_C2, _C1, _KH2, _KW2), _C1 * _KH2 * _KW2)
    p["b_c2"] = _uniform(ks[3], (_C2,), _C1 * _KH2 * _KW2)
    p["w_k1"] = _uniform(ks[4], (kin_dim, _KDIM), kin_dim)
    p["b_k1"] = _uniform(ks[5], (_KDIM,), kin_dim)
    p["w_k2"] = _uniform(ks[6], (_KDIM, _KDIM), _KDIM)
    p["b_k2"] = _uniform(ks[7], (_KDIM,), _KDIM)
    p["w_k3"] = _uniform(ks[8], (_KDIM, _KDIM), _KDIM)
    p["b_k3"] = _uniform(ks[9], (_KDIM,), _KDIM)
    oh1 = (H - _KH1) // _ST1 + 1
    ow1 = (W - _KW1) // _ST1 + 1
    oh2 = (oh1 - _KH2) // _ST2 + 1
    ow2 = (ow1 - _KW2) // _ST2 + 1
    concat_dim = _C2 * oh2 * ow2 + _KDIM
    p["w_f"] = _uniform(ks[10], (concat_dim, features_dim), concat_dim)
    p["b_f"] = _uniform(ks[11], (features_dim,), concat_dim)
    return p


# ----------------------------------------------------------------------------
# One-time weight layout plumbing (done once, NOT per forward step):
#  * conv weights reshaped/permuted for the in-kernel packing,
#  * final weight split into (s, c)-ordered lidar part + kinematics part,
#  * biases packed into a single (6, max(F,128)) f32 operand,
#  * everything the MXU touches is cast to bf16 once.
# ----------------------------------------------------------------------------
def prepare_params(params, lidar_shape, compute_dtype=jnp.bfloat16):
    C, H, W = lidar_shape
    oh1 = (H - _KH1) // _ST1 + 1
    ow1 = (W - _KW1) // _ST1 + 1
    oh2 = (oh1 - _KH2) // _ST2 + 1
    ow2 = (ow1 - _KW2) // _ST2 + 1
    s2 = oh2 * ow2
    feat = params["w_f"].shape[1]
    n_lid = _C2 * s2

    w1 = params["w_c1"].reshape(_C1, C * _KH1 * _KW1).T                  # [K1, 32]
    w2p = params["w_c2"].transpose(2, 3, 1, 0).reshape(_KK2 * _C1, _C2)  # [128, 64]
    wfl = params["w_f"][:n_lid].reshape(_C2, s2, feat).transpose(1, 0, 2) \
                               .reshape(s2 * _C2, feat)                  # rows (s, c)
    wfk = params["w_f"][n_lid:]                                          # [128, F]
    wk23 = jnp.stack([params["w_k2"], params["w_k3"]], axis=0)           # [2,128,128]

    bias_w = max(feat, _KK2 * _C1)
    def row(v):
        v = v.astype(jnp.float32)
        return jnp.pad(v, (0, bias_w - v.shape[0]))[None, :]
    biases = jnp.concatenate([
        row(jnp.tile(params["b_c1"], _KK2)),   # row 0: conv1 bias, tiled x4
        row(params["b_c2"]),                   # row 1: conv2 bias
        row(params["b_k1"]),                   # row 2..4: kinematics biases
        row(params["b_k2"]),
        row(params["b_k3"]),
        row(params["b_f"]),                    # row 5: final bias
    ], axis=0)

    cd = compute_dtype
    return {"w1": w1.astype(cd), "w2p": w2p.astype(cd), "wfl": wfl.astype(cd),
            "wfk": wfk.astype(cd), "wk1": params["w_k1"].astype(cd),
            "wk23": wk23.astype(cd), "biases": biases}


# ----------------------------------------------------------------------------
# Forward pass: one pallas_call, batch-tiled grid.
# ----------------------------------------------------------------------------
def mix_observation_nn_forward(prep, lidar_obs, kin_obs, *,
                               compute_dtype=jnp.bfloat16,
                               patch_block_budget_bytes=4 << 20):
    B, C, H, W = lidar_obs.shape
    k1 = C * _KH1 * _KW1
    feat = prep["wfk"].shape[1]

    oh1 = (H - _KH1) // _ST1 + 1
    ow1 = (W - _KW1) // _ST1 + 1
    oh2 = (oh1 - _KH2) // _ST2 + 1
    ow2 = (ow1 - _KW2) // _ST2 + 1
    s2 = oh2 * ow2

    # Batch block: multiple of 8, capped at 128 and by the patch-block VMEM
    # budget (keeps blocks small enough for v7x's 64 MiB VMEM at real sizes).
    itemsize = jnp.dtype(compute_dtype).itemsize
    b_ru = ((B + 7) // 8) * 8
    blk_cap = max(8, (patch_block_budget_bytes // (_KK2 * s2 * k1 * itemsize)) // 8 * 8)
    b_blk = int(min(b_ru, 128, blk_cap))
    b_pad = ((b_ru + b_blk - 1) // b_blk) * b_blk
    n_blocks = b_pad // b_blk

    patches, _, _ = _conv1_patches(lidar_obs, b_pad, compute_dtype)  # [kk2,s2,b_pad,K1]

    kin = kin_obs.reshape(B, -1)                        # flatten(start_dim=1)
    kin_dim = kin.shape[1]
    if b_pad > B:
        kin = jnp.pad(kin, ((0, b_pad - B), (0, 0)))
    kin = kin.astype(compute_dtype)

    kernel = functools.partial(_fused_kernel, kk2=_KK2, s2=s2, bblk=b_blk,
                               c1=_C1, c2=_C2)

    out = pl.pallas_call(
        kernel,
        out_shape=jax.ShapeDtypeStruct((b_pad, feat), jnp.float32),
        grid=(n_blocks,),
        in_specs=[
            pl.BlockSpec((_KK2, s2, b_blk, k1), lambda i: (0, 0, i, 0)),   # patches
            pl.BlockSpec((k1, _C1), lambda i: (0, 0)),                      # w1
            pl.BlockSpec((_KK2 * _C1, _C2), lambda i: (0, 0)),              # w2 packed
            pl.BlockSpec((s2 * _C2, feat), lambda i: (0, 0)),               # wfl
            pl.BlockSpec((b_blk, kin_dim), lambda i: (i, 0)),               # kin
            pl.BlockSpec((kin_dim, _KDIM), lambda i: (0, 0)),               # wk1
            pl.BlockSpec((2, _KDIM, _KDIM), lambda i: (0, 0, 0)),           # wk2/wk3
            pl.BlockSpec((_KDIM, feat), lambda i: (0, 0)),                  # wfk
            pl.BlockSpec(prep["biases"].shape, lambda i: (0, 0)),           # biases
        ],
        out_specs=pl.BlockSpec((b_blk, feat), lambda i: (i, 0)),
        scratch_shapes=[
            pltpu.VMEM((s2 * b_blk, _KK2 * _C1), jnp.float32),  # packed conv1 out
            pltpu.VMEM((s2 * b_blk, _C2), compute_dtype),       # conv2 out
            pltpu.VMEM((b_blk, feat), jnp.float32),             # final accumulator
        ],
        compiler_params=pltpu.CompilerParams(
            dimension_semantics=("parallel",)),
    )(patches, prep["w1"], prep["w2p"], prep["wfl"], kin,
      prep["wk1"], prep["wk23"], prep["wfk"], prep["biases"])

    return out[:B]


# ----------------------------------------------------------------------------
# Pure-JAX reference (mirrors the PyTorch module) for a correctness check.
# ----------------------------------------------------------------------------
def _reference_forward(params, lidar_obs, kin_obs):
    y = lax.conv_general_dilated(lidar_obs, params["w_c1"], (_ST1, _ST1), "VALID",
                                 dimension_numbers=("NCHW", "OIHW", "NCHW"))
    y = jnp.maximum(y + params["b_c1"].reshape(1, -1, 1, 1), 0.0)
    y = lax.conv_general_dilated(y, params["w_c2"], (_ST2, _ST2), "VALID",
                                 dimension_numbers=("NCHW", "OIHW", "NCHW"))
    y = jnp.maximum(y + params["b_c2"].reshape(1, -1, 1, 1), 0.0)
    lid = y.reshape(y.shape[0], -1)
    k = kin_obs.reshape(kin_obs.shape[0], -1)
    k = jnp.maximum(k @ params["w_k1"] + params["b_k1"], 0.0)
    k = jnp.maximum(k @ params["w_k2"] + params["b_k2"], 0.0)
    k = jnp.maximum(k @ params["w_k3"] + params["b_k3"], 0.0)
    cat = jnp.concatenate([lid, k], axis=1)
    return jnp.maximum(cat @ params["w_f"] + params["b_f"], 0.0)


if __name__ == "__main__":
    key = jax.random.PRNGKey(0)
    k_param, k_lidar, k_kin = jax.random.split(key, 3)

    B = 2
    lidar_shape = (4, 16, 16)    # (C, H, W): conv1 -> 3x3 spatial, conv2 -> 1x1
    kin_dim = 12
    features_dim = 256

    params = init_params(k_param, lidar_shape, kin_dim, features_dim)
    prep = prepare_params(params, lidar_shape)          # one-time layout plumbing
    lidar_obs = jax.random.normal(k_lidar, (B, *lidar_shape), jnp.float32)
    kin_obs = jax.random.normal(k_kin, (B, kin_dim), jnp.float32)

    fwd = jax.jit(mix_observation_nn_forward)
    out = jax.block_until_ready(fwd(prep, lidar_obs, kin_obs))

    assert out.shape == (B, features_dim), out.shape
    assert bool(jnp.all(out >= 0.0))                     # final ReLU

    ref = jax.block_until_ready(_reference_forward(params, lidar_obs, kin_obs))
    # bf16 MXU operands with f32 accumulation => ~1e-2-scale abs error budget.
    if not bool(jnp.allclose(out, ref, rtol=2e-2, atol=2e-2)):
        raise AssertionError(
            f"mismatch vs reference, max abs err {float(jnp.max(jnp.abs(out - ref)))}")

    print("KERNEL_OK")
</pallas_src>

<mosaic_0001>
module attributes {stable_mosaic.version = 11 : i64} {
  func.func @_fused_kernel(%arg0: i32, %arg1: memref<4x1x8x256xbf16, #tpu.memory_space<vmem>>, %arg2: memref<256x32xbf16, #tpu.memory_space<vmem>>, %arg3: memref<128x64xbf16, #tpu.memory_space<vmem>>, %arg4: memref<64x256xbf16, #tpu.memory_space<vmem>>, %arg5: memref<8x12xbf16, #tpu.memory_space<vmem>>, %arg6: memref<12x128xbf16, #tpu.memory_space<vmem>>, %arg7: memref<2x128x128xbf16, #tpu.memory_space<vmem>>, %arg8: memref<128x256xbf16, #tpu.memory_space<vmem>>, %arg9: memref<6x256xf32, #tpu.memory_space<vmem>>, %arg10: memref<8x256xf32, #tpu.memory_space<vmem>>, %arg11: memref<8x128xf32, #tpu.memory_space<vmem>>, %arg12: memref<8x64xbf16, #tpu.memory_space<vmem>>, %arg13: memref<8x256xf32, #tpu.memory_space<vmem>>) attributes {dimension_semantics = [#tpu.dimension_semantics<parallel>], iteration_bounds = array<i64: 1>, scalar_prefetch = 0 : i64, scratch_operands = 3 : i64, tpu.core_type = #tpu.core_type<tc>, window_params = [{transform_indices = @transform_0, window_bounds = array<i64: 4, 1, 8, 256>}, {pipeline_mode = #tpu.pipeline_mode<synchronous>, transform_indices = @transform_1, window_bounds = array<i64: 256, 32>}, {pipeline_mode = #tpu.pipeline_mode<synchronous>, transform_indices = @transform_2, window_bounds = array<i64: 128, 64>}, {pipeline_mode = #tpu.pipeline_mode<synchronous>, transform_indices = @transform_3, window_bounds = array<i64: 64, 256>}, {transform_indices = @transform_4, window_bounds = array<i64: 8, 12>}, {pipeline_mode = #tpu.pipeline_mode<synchronous>, transform_indices = @transform_5, window_bounds = array<i64: 12, 128>}, {pipeline_mode = #tpu.pipeline_mode<synchronous>, transform_indices = @transform_6, window_bounds = array<i64: 2, 128, 128>}, {pipeline_mode = #tpu.pipeline_mode<synchronous>, transform_indices = @transform_7, window_bounds = array<i64: 128, 256>}, {pipeline_mode = #tpu.pipeline_mode<synchronous>, transform_indices = @transform_8, window_bounds = array<i64: 6, 256>}, {transform_indices = @transform_9, window_bounds = array<i64: 8, 256>}]} {
    %c0 = arith.constant 0 : index
    %c0_0 = arith.constant 0 : index
    %0 = vector.load %arg2[%c0, %c0_0] : memref<256x32xbf16, #tpu.memory_space<vmem>>, vector<256x32xbf16>
    %c0_1 = arith.constant 0 : index
    %c0_2 = arith.constant 0 : index
    %c0_3 = arith.constant 0 : index
    %c0_4 = arith.constant 0 : index
    %1 = vector.load %arg1[%c0_1, %c0_2, %c0_3, %c0_4] : memref<4x1x8x256xbf16, #tpu.memory_space<vmem>>, vector<1x1x8x256xbf16>
    %2 = vector.shape_cast %1 : vector<1x1x8x256xbf16> to vector<1x8x256xbf16>
    %3 = vector.shape_cast %2 : vector<1x8x256xbf16> to vector<8x256xbf16>
    %cst = arith.constant dense<0.000000e+00> : vector<8x32xf32>
    %4 = tpu.matmul %3, %0, %cst {dimension_numbers = #tpu.dot_dimension_numbers<[1], [0], [0], [1], [0, 0, 1, 1], [], []>} : vector<8x256xbf16>, vector<256x32xbf16>, vector<8x32xf32> -> vector<8x32xf32>
    %c0_5 = arith.constant 0 : index
    %c0_6 = arith.constant 0 : index
    %5 = vector.load %arg11[%c0_5, %c0_6] : memref<8x128xf32, #tpu.memory_space<vmem>>, vector<8x32xf32>
    tpu.vector_store %arg11[%c0_5, %c0_6], %4 {strides = array<i32>} : memref<8x128xf32, #tpu.memory_space<vmem>>, vector<8x32xf32>,
    %c1 = arith.constant 1 : index
    %c0_7 = arith.constant 0 : index
    %c0_8 = arith.constant 0 : index
    %c0_9 = arith.constant 0 : index
    %6 = vector.load %arg1[%c1, %c0_7, %c0_8, %c0_9] : memref<4x1x8x256xbf16, #tpu.memory_space<vmem>>, vector<1x1x8x256xbf16>
    %7 = vector.shape_cast %6 : vector<1x1x8x256xbf16> to vector<1x8x256xbf16>
    %8 = vector.shape_cast %7 : vector<1x8x256xbf16> to vector<8x256xbf16>
    %cst_10 = arith.constant dense<0.000000e+00> : vector<8x32xf32>
    %9 = tpu.matmul %8, %0, %cst_10 {dimension_numbers = #tpu.dot_dimension_numbers<[1], [0], [0], [1], [0, 0, 1, 1], [], []>} : vector<8x256xbf16>, vector<256x32xbf16>, vector<8x32xf32> -> vector<8x32xf32>
    %c0_11 = arith.constant 0 : index
    %c32 = arith.constant 32 : index
    %10 = vector.load %arg11[%c0_11, %c32] : memref<8x128xf32, #tpu.memory_space<vmem>>, vector<8x32xf32>
    tpu.vector_store %arg11[%c0_11, %c32], %9 {strides = array<i32>} : memref<8x128xf32, #tpu.memory_space<vmem>>, vector<8x32xf32>,
    %c2 = arith.constant 2 : index
    %c0_12 = arith.constant 0 : index
    %c0_13 = arith.constant 0 : index
    %c0_14 = arith.constant 0 : index
    %11 = vector.load %arg1[%c2, %c0_12, %c0_13, %c0_14] : memref<4x1x8x256xbf16, #tpu.memory_space<vmem>>, vector<1x1x8x256xbf16>
    %12 = vector.shape_cast %11 : vector<1x1x8x256xbf16> to vector<1x8x256xbf16>
    %13 = vector.shape_cast %12 : vector<1x8x256xbf16> to vector<8x256xbf16>
    %cst_15 = arith.constant dense<0.000000e+00> : vector<8x32xf32>
    %14 = tpu.matmul %13, %0, %cst_15 {dimension_numbers = #tpu.dot_dimension_numbers<[1], [0], [0], [1], [0, 0, 1, 1], [], []>} : vector<8x256xbf16>, vector<256x32xbf16>, vector<8x32xf32> -> vector<8x32xf32>
    %c0_16 = arith.constant 0 : index
    %c64 = arith.constant 64 : index
    %15 = vector.load %arg11[%c0_16, %c64] : memref<8x128xf32, #tpu.memory_space<vmem>>, vector<8x32xf32>
    tpu.vector_store %arg11[%c0_16, %c64], %14 {strides = array<i32>} : memref<8x128xf32, #tpu.memory_space<vmem>>, vector<8x32xf32>,
    %c3 = arith.constant 3 : index
    %c0_17 = arith.constant 0 : index
    %c0_18 = arith.constant 0 : index
    %c0_19 = arith.constant 0 : index
    %16 = vector.load %arg1[%c3, %c0_17, %c0_18, %c0_19] : memref<4x1x8x256xbf16, #tpu.memory_space<vmem>>, vector<1x1x8x256xbf16>
    %17 = vector.shape_cast %16 : vector<1x1x8x256xbf16> to vector<1x8x256xbf16>
    %18 = vector.shape_cast %17 : vector<1x8x256xbf16> to vector<8x256xbf16>
    %cst_20 = arith.constant dense<0.000000e+00> : vector<8x32xf32>
    %19 = tpu.matmul %18, %0, %cst_20 {dimension_numbers = #tpu.dot_dimension_numbers<[1], [0], [0], [1], [0, 0, 1, 1], [], []>} : vector<8x256xbf16>, vector<256x32xbf16>, vector<8x32xf32> -> vector<8x32xf32>
    %c0_21 = arith.constant 0 : index
    %c96 = arith.constant 96 : index
    %20 = vector.load %arg11[%c0_21, %c96] : memref<8x128xf32, #tpu.memory_space<vmem>>, vector<8x32xf32>
    tpu.vector_store %arg11[%c0_21, %c96], %19 {strides = array<i32>} : memref<8x128xf32, #tpu.memory_space<vmem>>, vector<8x32xf32>,
    %c0_22 = arith.constant 0 : index
    %c0_23 = arith.constant 0 : index
    %21 = vector.load %arg9[%c0_22, %c0_23] : memref<6x256xf32, #tpu.memory_space<vmem>>, vector<1x128xf32>
    %c1_24 = arith.constant 1 : index
    %c0_25 = arith.constant 0 : index
    %22 = vector.load %arg9[%c1_24, %c0_25] : memref<6x256xf32, #tpu.memory_space<vmem>>, vector<1x64xf32>
    %c0_26 = arith.constant 0 : index
    %c0_27 = arith.constant 0 : index
    %23 = vector.load %arg11[%c0_26, %c0_27] : memref<8x128xf32, #tpu.memory_space<vmem>>, vector<8x128xf32>
    %24 = vector.broadcast %21 : vector<1x128xf32> to vector<8x128xf32>
    %25 = arith.addf %23, %24 : vector<8x128xf32>
    %cst_28 = arith.constant 0.000000e+00 : f32
    %26 = vector.broadcast %cst_28 : f32 to vector<8x128xf32>
    %27 = arith.maximumf %25, %26 : vector<8x128xf32>
    %28 = arith.truncf %27 : vector<8x128xf32> to vector<8x128xbf16>
    %c0_29 = arith.constant 0 : index
    %c0_30 = arith.constant 0 : index
    %29 = vector.load %arg3[%c0_29, %c0_30] : memref<128x64xbf16, #tpu.memory_space<vmem>>, vector<128x64xbf16>
    %cst_31 = arith.constant dense<0.000000e+00> : vector<8x64xf32>
    %30 = tpu.matmul %28, %29, %cst_31 {dimension_numbers = #tpu.dot_dimension_numbers<[1], [0], [0], [1], [0, 0, 1, 1], [], []>} : vector<8x128xbf16>, vector<128x64xbf16>, vector<8x64xf32> -> vector<8x64xf32>
    %31 = vector.broadcast %22 : vector<1x64xf32> to vector<8x64xf32>
    %32 = arith.addf %30, %31 : vector<8x64xf32>
    %cst_32 = arith.constant 0.000000e+00 : f32
    %33 = vector.broadcast %cst_32 : f32 to vector<8x64xf32>
    %34 = arith.maximumf %32, %33 : vector<8x64xf32>
    %35 = arith.truncf %34 : vector<8x64xf32> to vector<8x64xbf16>
    %c0_33 = arith.constant 0 : index
    %c0_34 = arith.constant 0 : index
    %36 = vector.load %arg12[%c0_33, %c0_34] : memref<8x64xbf16, #tpu.memory_space<vmem>>, vector<8x64xbf16>
    tpu.vector_store %arg12[%c0_33, %c0_34], %35 {strides = array<i32>} : memref<8x64xbf16, #tpu.memory_space<vmem>>, vector<8x64xbf16>,
    %c2_35 = arith.constant 2 : index
    %c0_36 = arith.constant 0 : index
    %37 = vector.load %arg9[%c2_35, %c0_36] : memref<6x256xf32, #tpu.memory_space<vmem>>, vector<1x128xf32>
    %c3_37 = arith.constant 3 : index
    %c0_38 = arith.constant 0 : index
    %38 = vector.load %arg9[%c3_37, %c0_38] : memref<6x256xf32, #tpu.memory_space<vmem>>, vector<1x128xf32>
    %c4 = arith.constant 4 : index
    %c0_39 = arith.constant 0 : index
    %39 = vector.load %arg9[%c4, %c0_39] : memref<6x256xf32, #tpu.memory_space<vmem>>, vector<1x128xf32>
    %c0_40 = arith.constant 0 : index
    %c0_41 = arith.constant 0 : index
    %40 = vector.load %arg5[%c0_40, %c0_41] : memref<8x12xbf16, #tpu.memory_space<vmem>>, vector<8x12xbf16>
    %c0_42 = arith.constant 0 : index
    %c0_43 = arith.constant 0 : index
    %41 = vector.load %arg6[%c0_42, %c0_43] : memref<12x128xbf16, #tpu.memory_space<vmem>>, vector<12x128xbf16>
    %cst_44 = arith.constant dense<0.000000e+00> : vector<8x128xf32>
    %42 = tpu.matmul %40, %41, %cst_44 {dimension_numbers = #tpu.dot_dimension_numbers<[1], [0], [0], [1], [0, 0, 1, 1], [], []>} : vector<8x12xbf16>, vector<12x128xbf16>, vector<8x128xf32> -> vector<8x128xf32>
    %43 = vector.broadcast %37 : vector<1x128xf32> to vector<8x128xf32>
    %44 = arith.addf %42, %43 : vector<8x128xf32>
    %cst_45 = arith.constant 0.000000e+00 : f32
    %45 = vector.broadcast %cst_45 : f32 to vector<8x128xf32>
    %46 = arith.maximumf %44, %45 : vector<8x128xf32>
    %47 = arith.truncf %46 : vector<8x128xf32> to vector<8x128xbf16>
    %c0_46 = arith.constant 0 : index
    %c0_47 = arith.constant 0 : index
    %c0_48 = arith.constant 0 : index
    %48 = vector.load %arg7[%c0_46, %c0_47, %c0_48] : memref<2x128x128xbf16, #tpu.memory_space<vmem>>, vector<1x128x128xbf16>
    %49 = vector.shape_cast %48 : vector<1x128x128xbf16> to vector<128x128xbf16>
    %cst_49 = arith.constant dense<0.000000e+00> : vector<8x128xf32>
    %50 = tpu.matmul %47, %49, %cst_49 {dimension_numbers = #tpu.dot_dimension_numbers<[1], [0], [0], [1], [0, 0, 1, 1], [], []>} : vector<8x128xbf16>, vector<128x128xbf16>, vector<8x128xf32> -> vector<8x128xf32>
    %51 = vector.broadcast %38 : vector<1x128xf32> to vector<8x128xf32>
    %52 = arith.addf %50, %51 : vector<8x128xf32>
    %cst_50 = arith.constant 0.000000e+00 : f32
    %53 = vector.broadcast %cst_50 : f32 to vector<8x128xf32>
    %54 = arith.maximumf %52, %53 : vector<8x128xf32>
    %55 = arith.truncf %54 : vector<8x128xf32> to vector<8x128xbf16>
    %c1_51 = arith.constant 1 : index
    %c0_52 = arith.constant 0 : index
    %c0_53 = arith.constant 0 : index
    %56 = vector.load %arg7[%c1_51, %c0_52, %c0_53] : memref<2x128x128xbf16, #tpu.memory_space<vmem>>, vector<1x128x128xbf16>
    %57 = vector.shape_cast %56 : vector<1x128x128xbf16> to vector<128x128xbf16>
    %cst_54 = arith.constant dense<0.000000e+00> : vector<8x128xf32>
    %58 = tpu.matmul %55, %57, %cst_54 {dimension_numbers = #tpu.dot_dimension_numbers<[1], [0], [0], [1], [0, 0, 1, 1], [], []>} : vector<8x128xbf16>, vector<128x128xbf16>, vector<8x128xf32> -> vector<8x128xf32>
    %59 = vector.broadcast %39 : vector<1x128xf32> to vector<8x128xf32>
    %60 = arith.addf %58, %59 : vector<8x128xf32>
    %cst_55 = arith.constant 0.000000e+00 : f32
    %61 = vector.broadcast %cst_55 : f32 to vector<8x128xf32>
    %62 = arith.maximumf %60, %61 : vector<8x128xf32>
    %c5 = arith.constant 5 : index
    %c0_56 = arith.constant 0 : index
    %63 = vector.load %arg9[%c5, %c0_56] : memref<6x256xf32, #tpu.memory_space<vmem>>, vector<1x256xf32>
    %64 = arith.truncf %62 : vector<8x128xf32> to vector<8x128xbf16>
    %c0_57 = arith.constant 0 : index
    %c0_58 = arith.constant 0 : index
    %65 = vector.load %arg8[%c0_57, %c0_58] : memref<128x256xbf16, #tpu.memory_space<vmem>>, vector<128x256xbf16>
    %cst_59 = arith.constant dense<0.000000e+00> : vector<8x256xf32>
    %66 = tpu.matmul %64, %65, %cst_59 {dimension_numbers = #tpu.dot_dimension_numbers<[1], [0], [0], [1], [0, 0, 1, 1], [], []>} : vector<8x128xbf16>, vector<128x256xbf16>, vector<8x256xf32> -> vector<8x256xf32>
    %67 = vector.broadcast %63 : vector<1x256xf32> to vector<8x256xf32>
    %68 = arith.addf %66, %67 : vector<8x256xf32>
    %c0_60 = arith.constant 0 : index
    %c0_61 = arith.constant 0 : index
    %69 = vector.load %arg13[%c0_60, %c0_61] : memref<8x256xf32, #tpu.memory_space<vmem>>, vector<8x256xf32>
    tpu.vector_store %arg13[%c0_60, %c0_61], %68 {strides = array<i32>} : memref<8x256xf32, #tpu.memory_space<vmem>>, vector<8x256xf32>,
    %c0_i32 = arith.constant 0 : i32
    %c8_i32 = arith.constant 8 : i32
    %70 = arith.muli %c0_i32, %c8_i32 : i32
    %71 = tpu.assume_multiple %70, 8 : i32
    %c64_i32 = arith.constant 64 : i32
    %72 = arith.muli %c0_i32, %c64_i32 : i32
    %73 = tpu.assume_multiple %72, 8 : i32
    %c0_62 = arith.constant 0 : index
    %c0_63 = arith.constant 0 : index
    %74 = vector.load %arg13[%c0_62, %c0_63] : memref<8x256xf32, #tpu.memory_space<vmem>>, vector<8x256xf32>
    %75 = arith.index_cast %71 : i32 to index
    %c0_64 = arith.constant 0 : index
    %76 = vector.load %arg12[%75, %c0_64] : memref<8x64xbf16, #tpu.memory_space<vmem>>, vector<8x64xbf16>
    %77 = arith.index_cast %73 : i32 to index
    %c0_65 = arith.constant 0 : index
    %78 = vector.load %arg4[%77, %c0_65] : memref<64x256xbf16, #tpu.memory_space<vmem>>, vector<64x256xbf16>
    %cst_66 = arith.constant dense<0.000000e+00> : vector<8x256xf32>
    %79 = tpu.matmul %76, %78, %cst_66 {dimension_numbers = #tpu.dot_dimension_numbers<[1], [0], [0], [1], [0, 0, 1, 1], [], []>} : vector<8x64xbf16>, vector<64x256xbf16>, vector<8x256xf32> -> vector<8x256xf32>
    %80 = arith.addf %74, %79 : vector<8x256xf32>
    %c0_67 = arith.constant 0 : index
    %c0_68 = arith.constant 0 : index
    %81 = vector.load %arg13[%c0_67, %c0_68] : memref<8x256xf32, #tpu.memory_space<vmem>>, vector<8x256xf32>
    tpu.vector_store %arg13[%c0_67, %c0_68], %80 {strides = array<i32>} : memref<8x256xf32, #tpu.memory_space<vmem>>, vector<8x256xf32>,
    %c1_i32 = arith.constant 1 : i32
    %c0_69 = arith.constant 0 : index
    %c0_70 = arith.constant 0 : index
    %82 = vector.load %arg13[%c0_69, %c0_70] : memref<8x256xf32, #tpu.memory_space<vmem>>, vector<8x256xf32>
    %cst_71 = arith.constant 0.000000e+00 : f32
    %83 = vector.broadcast %cst_71 : f32 to vector<8x256xf32>
    %84 = arith.maximumf %82, %83 : vector<8x256xf32>
    %c0_72 = arith.constant 0 : index
    %c0_73 = arith.constant 0 : index
    %85 = vector.load %arg10[%c0_72, %c0_73] : memref<8x256xf32, #tpu.memory_space<vmem>>, vector<8x256xf32>
    tpu.vector_store %arg10[%c0_72, %c0_73], %84 {strides = array<i32>} : memref<8x256xf32, #tpu.memory_space<vmem>>, vector<8x256xf32>,
    return
  }
  func.func @transform_0(%arg0: i32) -> (i32, i32, i32, i32) {
    %c0_i32 = arith.constant 0 : i32
    %c0_i32_0 = arith.constant 0 : i32
    %c0_i32_1 = arith.constant 0 : i32
    %c0_i32_2 = arith.constant 0 : i32
    return %c0_i32, %c0_i32_0, %arg0, %c0_i32_1 : i32, i32, i32, i32
  }
  func.func @transform_1(%arg0: i32) -> (i32, i32) {
    %c0_i32 = arith.constant 0 : i32
    %c0_i32_0 = arith.constant 0 : i32
    %c0_i32_1 = arith.constant 0 : i32
    return %c0_i32, %c0_i32_0 : i32, i32
  }
  func.func @transform_2(%arg0: i32) -> (i32, i32) {
    %c0_i32 = arith.constant 0 : i32
    %c0_i32_0 = arith.constant 0 : i32
    %c0_i32_1 = arith.constant 0 : i32
    return %c0_i32, %c0_i32_0 : i32, i32
  }
  func.func @transform_3(%arg0: i32) -> (i32, i32) {
    %c0_i32 = arith.constant 0 : i32
    %c0_i32_0 = arith.constant 0 : i32
    %c0_i32_1 = arith.constant 0 : i32
    return %c0_i32, %c0_i32_0 : i32, i32
  }
  func.func @transform_4(%arg0: i32) -> (i32, i32) {
    %c0_i32 = arith.constant 0 : i32
    %c0_i32_0 = arith.constant 0 : i32
    return %arg0, %c0_i32 : i32, i32
  }
  func.func @transform_5(%arg0: i32) -> (i32, i32) {
    %c0_i32 = arith.constant 0 : i32
    %c0_i32_0 = arith.constant 0 : i32
    %c0_i32_1 = arith.constant 0 : i32
    return %c0_i32, %c0_i32_0 : i32, i32
  }
  func.func @transform_6(%arg0: i32) -> (i32, i32, i32) {
    %c0_i32 = arith.constant 0 : i32
    %c0_i32_0 = arith.constant 0 : i32
    %c0_i32_1 = arith.constant 0 : i32
    %c0_i32_2 = arith.constant 0 : i32
    return %c0_i32, %c0_i32_0, %c0_i32_1 : i32, i32, i32
  }
  func.func @transform_7(%arg0: i32) -> (i32, i32) {
    %c0_i32 = arith.constant 0 : i32
    %c0_i32_0 = arith.constant 0 : i32
    %c0_i32_1 = arith.constant 0 : i32
    return %c0_i32, %c0_i32_0 : i32, i32
  }
  func.func @transform_8(%arg0: i32) -> (i32, i32) {
    %c0_i32 = arith.constant 0 : i32
    %c0_i32_0 = arith.constant 0 : i32
    %c0_i32_1 = arith.constant 0 : i32
    return %c0_i32, %c0_i32_0 : i32, i32
  }
  func.func @transform_9(%arg0: i32) -> (i32, i32) {
    %c0_i32 = arith.constant 0 : i32
    %c0_i32_0 = arith.constant 0 : i32
    return %arg0, %c0_i32 : i32, i32
  }
}

</mosaic_0001>

<llo_original>
// kernel: mix_observation_nn_forward.1
$region0: #{mix_observation_nn_forward.1}
  #allocation0 [shape = 'u32[]', space=smem, size = 0x4, offset = 0x4, fixed_abs, tag = 'smem constant byte address 0x4 - core index']
  #allocation1 [shape = 'u32[144,128]{1,0:T(1,128)}', space=vmem, size = 0x12000, scoped, tag = 'internal scratch']
  #allocation2 [shape = 'f32[8,128]{1,0:T(8,128)}', space=vmem, size = 0x1000, scoped, tag = 'scratch operand']
  #allocation3 [shape = 'bf16[8,64]{1,0:T(8,128)(2,1)}', space=vmem, size = 0x800, scoped, tag = 'scratch operand']
  #allocation4 [shape = 'f32[8,256]{1,0:T(8,128)}', space=vmem, size = 0x2000, scoped, tag = 'scratch operand']
  %s0 = inlined_call_operand.vmem [shape: bf16[4,1,8,256], index: 0, kind: input, shape index: {}]
  %s1 = inlined_call_operand.vmem [shape: bf16[256,32], index: 1, kind: input, shape index: {}]
  %s2 = inlined_call_operand.vmem [shape: bf16[128,64], index: 2, kind: input, shape index: {}]
  %s3 = inlined_call_operand.vmem [shape: bf16[64,256], index: 3, kind: input, shape index: {}]
  %s4 = inlined_call_operand.vmem [shape: bf16[8,12], index: 4, kind: input, shape index: {}]
  %s5 = inlined_call_operand.vmem [shape: bf16[12,128], index: 5, kind: input, shape index: {}]
  %s6 = inlined_call_operand.vmem [shape: bf16[2,128,128], index: 6, kind: input, shape index: {}]
  %s7 = inlined_call_operand.vmem [shape: bf16[128,256], index: 7, kind: input, shape index: {}]
  %s8 = inlined_call_operand.vmem [shape: f32[6,256], index: 8, kind: input, shape index: {}]
  %s9 = inlined_call_operand.vmem [shape: f32[8,256], index: 9, kind: output, shape index: {}]
  %s10 = sld [smem:[#allocation0]]
  $region46: #{mix_observation_nn_forward.1} parent=0
    _
  %s12 = ssub.s32 1, %s10
  %s13 = scalar_select 0, %s12, %s10
  // Predicated region
  $region2: #{mix_observation_nn_forward.1} parent=0 // pred_check
    _
  $region3: #{mix_observation_nn_forward.1} parent=0 // pred_check_branch
    %15 = sbr.rel (0) target = $region5
  $region4: #{mix_observation_nn_forward.1} parent=0 // pred_region
    _
  $region5: #{mix_observation_nn_forward.1} parent=0 // pred_fallthru
    _
  // Predicated region
  $region6: #{mix_observation_nn_forward.1} parent=0 // pred_check
    _
  $region7: #{mix_observation_nn_forward.1} parent=0 // pred_check_branch
    %17 = sbr.rel (0) target = $region9
  $region8: #{mix_observation_nn_forward.1} parent=0 // pred_region
    _
  $region9: #{mix_observation_nn_forward.1} parent=0 // pred_fallthru
    _
  // Predicated region
  $region10: #{mix_observation_nn_forward.1} parent=0 // pred_check
    _
  $region11: #{mix_observation_nn_forward.1} parent=0 // pred_check_branch
    %19 = sbr.rel (0) target = $region13
  $region12: #{mix_observation_nn_forward.1} parent=0 // pred_region
    _
  $region13: #{mix_observation_nn_forward.1} parent=0 // pred_fallthru
    _
  // Predicated region
  $region14: #{mix_observation_nn_forward.1} parent=0 // pred_check
    _
  $region15: #{mix_observation_nn_forward.1} parent=0 // pred_check_branch
    %21 = sbr.rel (0) target = $region17
  $region16: #{mix_observation_nn_forward.1} parent=0 // pred_region
    _
  $region17: #{mix_observation_nn_forward.1} parent=0 // pred_fallthru
    _
  // Predicated region
  $region18: #{mix_observation_nn_forward.1} parent=0 // pred_check
    _
  $region19: #{mix_observation_nn_forward.1} parent=0 // pred_check_branch
    %23 = sbr.rel (0) target = $region21
  $region20: #{mix_observation_nn_forward.1} parent=0 // pred_region
    _
  $region21: #{mix_observation_nn_forward.1} parent=0 // pred_fallthru
    _
  // Predicated region
  $region22: #{mix_observation_nn_forward.1} parent=0 // pred_check
    _
  $region23: #{mix_observation_nn_forward.1} parent=0 // pred_check_branch
    %25 = sbr.rel (0) target = $region25
  $region24: #{mix_observation_nn_forward.1} parent=0 // pred_region
    _
  $region25: #{mix_observation_nn_forward.1} parent=0 // pred_fallthru
    _
  // Predicated region
  $region26: #{mix_observation_nn_forward.1} parent=0 // pred_check
    _
  $region27: #{mix_observation_nn_forward.1} parent=0 // pred_check_branch
    %27 = sbr.rel (0) target = $region29
  $region28: #{mix_observation_nn_forward.1} parent=0 // pred_region
    _
  $region29: #{mix_observation_nn_forward.1} parent=0 // pred_fallthru
    _
  // Predicated region
  $region30: #{mix_observation_nn_forward.1} parent=0 // pred_check
    _
  $region31: #{mix_observation_nn_forward.1} parent=0 // pred_check_branch
    %29 = sbr.rel (0) target = $region33
  $region32: #{mix_observation_nn_forward.1} parent=0 // pred_region
    _
  $region33: #{mix_observation_nn_forward.1} parent=0 // pred_fallthru
    _
  // Predicated region
  $region34: #{mix_observation_nn_forward.1} parent=0 // pred_check
    _
  $region35: #{mix_observation_nn_forward.1} parent=0 // pred_check_branch
    %31 = sbr.rel (0) target = $region37
  $region36: #{mix_observation_nn_forward.1} parent=0 // pred_region
    _
  $region37: #{mix_observation_nn_forward.1} parent=0 // pred_fallthru
    _
  %v33 = vld [vmem:[%s1] sm:$0xf]
  %v34 = vld [vmem:[%s1 + $0x4] sm:$0xf]
  %v35 = vld [vmem:[%s1 + $0x8] sm:$0xf]
  %v36 = vld [vmem:[%s1 + $0xc] sm:$0xf]
  %v37 = vld [vmem:[%s1 + $0x10] sm:$0xf]
  %v38 = vld [vmem:[%s1 + $0x14] sm:$0xf]
  %v39 = vld [vmem:[%s1 + $0x18] sm:$0xf]
  %v40 = vld [vmem:[%s1 + $0x1c] sm:$0xf]
  %v41 = vld [vmem:[%s1 + $0x20] sm:$0xf]
  %v42 = vld [vmem:[%s1 + $0x24] sm:$0xf]
  %v43 = vld [vmem:[%s1 + $0x28] sm:$0xf]
  %v44 = vld [vmem:[%s1 + $0x2c] sm:$0xf]
  %v45 = vld [vmem:[%s1 + $0x30] sm:$0xf]
  %v46 = vld [vmem:[%s1 + $0x34] sm:$0xf]
  %v47 = vld [vmem:[%s1 + $0x38] sm:$0xf]
  %v48 = vld [vmem:[%s1 + $0x3c] sm:$0xf]
  %v49 = vld [vmem:[%s1 + $0x40] sm:$0xf]
  %v50 = vld [vmem:[%s1 + $0x44] sm:$0xf]
  %v51 = vld [vmem:[%s1 + $0x48] sm:$0xf]
  %v52 = vld [vmem:[%s1 + $0x4c] sm:$0xf]
  %v53 = vld [vmem:[%s1 + $0x50] sm:$0xf]
  %v54 = vld [vmem:[%s1 + $0x54] sm:$0xf]
  %v55 = vld [vmem:[%s1 + $0x58] sm:$0xf]
  %v56 = vld [vmem:[%s1 + $0x5c] sm:$0xf]
  %v57 = vld [vmem:[%s1 + $0x60] sm:$0xf]
  %v58 = vld [vmem:[%s1 + $0x64] sm:$0xf]
  %v59 = vld [vmem:[%s1 + $0x68] sm:$0xf]
  %v60 = vld [vmem:[%s1 + $0x6c] sm:$0xf]
  %v61 = vld [vmem:[%s1 + $0x70] sm:$0xf]
  %v62 = vld [vmem:[%s1 + $0x74] sm:$0xf]
  %v63 = vld [vmem:[%s1 + $0x78] sm:$0xf]
  %v64 = vld [vmem:[%s1 + $0x7c] sm:$0xf]
  %v65 = vld [vmem:[%s0] sm:$0xff]
  %v67 = vunpack.c.l.b16 %v65
  %v68 = vunpack.c.h.b16 %v65
  %v69 = vpack.c.b16 %v67, %v67
  %v70 = vpack.c.b16 %v68, %v68
  %v105 = vunpack.c.l.b16 %v33
  %v106 = vunpack.c.l.b16 %v34
  %v107 = vunpack.c.l.b16 %v35
  %v108 = vunpack.c.l.b16 %v36
  %v109 = vunpack.c.l.b16 %v37
  %v110 = vunpack.c.l.b16 %v38
  %v111 = vunpack.c.l.b16 %v39
  %v112 = vunpack.c.l.b16 %v40
  %v113 = vunpack.c.l.b16 %v41
  %v114 = vunpack.c.l.b16 %v42
  %v115 = vunpack.c.l.b16 %v43
  %v116 = vunpack.c.l.b16 %v44
  %v117 = vunpack.c.l.b16 %v45
  %v118 = vunpack.c.l.b16 %v46
  %v119 = vunpack.c.l.b16 %v47
  %v120 = vunpack.c.l.b16 %v48
  %v121 = vunpack.c.l.b16 %v49
  %v122 = vunpack.c.l.b16 %v50
  %v123 = vunpack.c.l.b16 %v51
  %v124 = vunpack.c.l.b16 %v52
  %v125 = vunpack.c.l.b16 %v53
  %v126 = vunpack.c.l.b16 %v54
  %v127 = vunpack.c.l.b16 %v55
  %v128 = vunpack.c.l.b16 %v56
  %v129 = vunpack.c.l.b16 %v57
  %v130 = vunpack.c.l.b16 %v58
  %v131 = vunpack.c.l.b16 %v59
  %v132 = vunpack.c.l.b16 %v60
  %v133 = vunpack.c.l.b16 %v61
  %v134 = vunpack.c.l.b16 %v62
  %v135 = vunpack.c.l.b16 %v63
  %v136 = vunpack.c.l.b16 %v64
  %v137 = vpack.c.b16 %v106, %v105
  %v138 = vpack.c.b16 %v108, %v107
  %v139 = vpack.c.b16 %v110, %v109
  %v140 = vpack.c.b16 %v112, %v111
  %v141 = vpack.c.b16 %v114, %v113
  %v142 = vpack.c.b16 %v116, %v115
  %v143 = vpack.c.b16 %v118, %v117
  %v144 = vpack.c.b16 %v120, %v119
  %v145 = vpack.c.b16 %v122, %v121
  %v146 = vpack.c.b16 %v124, %v123
  %v147 = vpack.c.b16 %v126, %v125
  %v148 = vpack.c.b16 %v128, %v127
  %v149 = vpack.c.b16 %v130, %v129
  %v150 = vpack.c.b16 %v132, %v131
  %v151 = vpack.c.b16 %v134, %v133
  %v152 = vpack.c.b16 %v136, %v135
  %169 = vmatprep.subr.bf16.mxu0 0
  %170 = vmatpush1.bf16.msra.mxu0 %v144
  %171 = vmatprep.subr.bf16.mxu0 0
  %172 = vmatpush1.bf16.msra.mxu0 %v143
  %173 = vmatprep.subr.bf16.mxu0 0
  %174 = vmatpush1.bf16.msra.mxu0 %v142
  %175 = vmatprep.subr.bf16.mxu0 0
  %176 = vmatpush1.bf16.msra.mxu0 %v141
  %177 = vmatprep.subr.bf16.mxu0 0
  %178 = vmatpush1.bf16.msra.mxu0 %v140
  %179 = vmatprep.subr.bf16.mxu0 0
  %180 = vmatpush1.bf16.msra.mxu0 %v139
  %181 = vmatprep.subr.bf16.mxu0 0
  %182 = vmatpush1.bf16.msra.mxu0 %v138
  %183 = vmatprep.subr.bf16.mxu0 0
  %184 = vmatpush1.bf16.msra.mxu0 %v137
  %185 = vmatprep.subr.bf16.mxu0 0
  %186 = vmatpush2.bf16.msra.mxu0 %v152
  %187 = vmatprep.subr.bf16.mxu0 0
  %188 = vmatpush2.bf16.msra.mxu0 %v151
  %189 = vmatprep.subr.bf16.mxu0 0
  %190 = vmatpush2.bf16.msra.mxu0 %v150
  %191 = vmatprep.subr.bf16.mxu0 0
  %192 = vmatpush2.bf16.msra.mxu0 %v149
  %193 = vmatprep.subr.bf16.mxu0 0
  %194 = vmatpush2.bf16.msra.mxu0 %v148
  %195 = vmatprep.subr.bf16.mxu0 0
  %196 = vmatpush2.bf16.msra.mxu0 %v147
  %197 = vmatprep.subr.bf16.mxu0 0
  %198 = vmatpush2.bf16.msra.mxu0 %v146
  %199 = vmatprep.subr.bf16.mxu0 0
  %200 = vmatpush2.bf16.msra.mxu0 %v145
  %201 = vmatprep.mubr.bf16.mxu0 %v70
  %202 = vmatmul.mubr.bf16.gmra.mxu0 %v69
  %v203 = vpop.f32.mrf.mxu0
  %v204 = vadd.f32 0.0, %v203
  %v205 = vpop.f32.mrf.mxu0
  %v206 = vpop.f32.mrf.mxu0
  %v207 = vpop.f32.mrf.mxu0
  %208 = vdwg.mxu0
  %vm209 = vcmask 261120
  %210 = vst.msk [vmem:[#allocation2] sm:$0xff] %vm209, %v204
  %s211 = scalar_lea.vmem %s0, 8
  %v212 = vld [vmem:[%s211] sm:$0xff]
  %v214 = vunpack.c.l.b16 %v212
  %v215 = vunpack.c.h.b16 %v212
  %v216 = vpack.c.b16 %v214, %v214
  %v217 = vpack.c.b16 %v215, %v215
  %220 = vmatprep.subr.bf16.mxu0 0
  %221 = vmatpush1.bf16.msra.mxu0 %v144
  %222 = vmatprep.subr.bf16.mxu0 0
  %223 = vmatpush1.bf16.msra.mxu0 %v143
  %224 = vmatprep.subr.bf16.mxu0 0
  %225 = vmatpush1.bf16.msra.mxu0 %v142
  %226 = vmatprep.subr.bf16.mxu0 0
  %227 = vmatpush1.bf16.msra.mxu0 %v141
  %228 = vmatprep.subr.bf16.mxu0 0
  %229 = vmatpush1.bf16.msra.mxu0 %v140
  %230 = vmatprep.subr.bf16.mxu0 0
  %231 = vmatpush1.bf16.msra.mxu0 %v139
  %232 = vmatprep.subr.bf16.mxu0 0
  %233 = vmatpush1.bf16.msra.mxu0 %v138
  %234 = vmatprep.subr.bf16.mxu0 0
  %235 = vmatpush1.bf16.msra.mxu0 %v137
  %236 = vmatprep.subr.bf16.mxu0 0
  %237 = vmatpush2.bf16.msra.mxu0 %v152
  %238 = vmatprep.subr.bf16.mxu0 0
  %239 = vmatpush2.bf16.msra.mxu0 %v151
  %240 = vmatprep.subr.bf16.mxu0 0
  %241 = vmatpush2.bf16.msra.mxu0 %v150
  %242 = vmatprep.subr.bf16.mxu0 0
  %243 = vmatpush2.bf16.msra.mxu0 %v149
  %244 = vmatprep.subr.bf16.mxu0 0
  %245 = vmatpush2.bf16.msra.mxu0 %v148
  %246 = vmatprep.subr.bf16.mxu0 0
  %247 = vmatpush2.bf16.msra.mxu0 %v147
  %248 = vmatprep.subr.bf16.mxu0 0
  %249 = vmatpush2.bf16.msra.mxu0 %v146
  %250 = vmatprep.subr.bf16.mxu0 0
  %251 = vmatpush2.bf16.msra.mxu0 %v145
  %252 = vmatprep.mubr.bf16.mxu0 %v217
  %253 = vmatmul.mubr.bf16.gmra.mxu0 %v216
  %v254 = vpop.f32.mrf.mxu0
  %v255 = vadd.f32 0.0, %v254
  %v256 = vpop.f32.mrf.mxu0
  %v257 = vpop.f32.mrf.mxu0
  %v258 = vpop.f32.mrf.mxu0
  %259 = vdwg.mxu0
  %261 = vrot.lane.b32.xlu0 %v255, 32
  %v262 = vpop.permute.xlu0 %261
  %vm264 = vcmask 523520
  %265 = vst.msk [vmem:[#allocation2] sm:$0xff] %vm264, %v262
  %s266 = scalar_lea.vmem %s0, 16
  %v267 = vld [vmem:[%s266] sm:$0xff]
  %v269 = vunpack.c.l.b16 %v267
  %v270 = vunpack.c.h.b16 %v267
  %v271 = vpack.c.b16 %v269, %v269
  %v272 = vpack.c.b16 %v270, %v270
  %275 = vmatprep.subr.bf16.mxu0 0
  %276 = vmatpush1.bf16.msra.mxu0 %v144
  %277 = vmatprep.subr.bf16.mxu0 0
  %278 = vmatpush1.bf16.msra.mxu0 %v143
  %279 = vmatprep.subr.bf16.mxu0 0
  %280 = vmatpush1.bf16.msra.mxu0 %v142
  %281 = vmatprep.subr.bf16.mxu0 0
  %282 = vmatpush1.bf16.msra.mxu0 %v141
  %283 = vmatprep.subr.bf16.mxu0 0
  %284 = vmatpush1.bf16.msra.mxu0 %v140
  %285 = vmatprep.subr.bf16.mxu0 0
  %286 = vmatpush1.bf16.msra.mxu0 %v139
  %287 = vmatprep.subr.bf16.mxu0 0
  %288 = vmatpush1.bf16.msra.mxu0 %v138
  %289 = vmatprep.subr.bf16.mxu0 0
  %290 = vmatpush1.bf16.msra.mxu0 %v137
  %291 = vmatprep.subr.bf16.mxu0 0
  %292 = vmatpush2.bf16.msra.mxu0 %v152
  %293 = vmatprep.subr.bf16.mxu0 0
  %294 = vmatpush2.bf16.msra.mxu0 %v151
  %295 = vmatprep.subr.bf16.mxu0 0
  %296 = vmatpush2.bf16.msra.mxu0 %v150
  %297 = vmatprep.subr.bf16.mxu0 0
  %298 = vmatpush2.bf16.msra.mxu0 %v149
  %299 = vmatprep.subr.bf16.mxu0 0
  %300 = vmatpush2.bf16.msra.mxu0 %v148
  %301 = vmatprep.subr.bf16.mxu0 0
  %302 = vmatpush2.bf16.msra.mxu0 %v147
  %303 = vmatprep.subr.bf16.mxu0 0
  %304 = vmatpush2.bf16.msra.mxu0 %v146
  %305 = vmatprep.subr.bf16.mxu0 0
  %306 = vmatpush2.bf16.msra.mxu0 %v145
  %307 = vmatprep.mubr.bf16.mxu0 %v272
  %308 = vmatmul.mubr.bf16.gmra.mxu0 %v271
  %v309 = vpop.f32.mrf.mxu0
  %v310 = vadd.f32 0.0, %v309
  %v311 = vpop.f32.mrf.mxu0
  %v312 = vpop.f32.mrf.mxu0
  %v313 = vpop.f32.mrf.mxu0
  %314 = vdwg.mxu0
  %316 = vrot.lane.b32.xlu0 %v310, 64
  %v317 = vpop.permute.xlu0 %316
  %vm319 = vcmask 785920
  %320 = vst.msk [vmem:[#allocation2] sm:$0xff] %vm319, %v317
  %s321 = scalar_lea.vmem %s0, 24
  %v322 = vld [vmem:[%s321] sm:$0xff]
  %v324 = vunpack.c.l.b16 %v322
  %v325 = vunpack.c.h.b16 %v322
  %v326 = vpack.c.b16 %v324, %v324
  %v327 = vpack.c.b16 %v325, %v325
  %330 = vmatprep.subr.bf16.mxu0 0
  %331 = vmatpush1.bf16.msra.mxu0 %v144
  %332 = vmatprep.subr.bf16.mxu0 0
  %333 = vmatpush1.bf16.msra.mxu0 %v143
  %334 = vmatprep.subr.bf16.mxu0 0
  %335 = vmatpush1.bf16.msra.mxu0 %v142
  %336 = vmatprep.subr.bf16.mxu0 0
  %337 = vmatpush1.bf16.msra.mxu0 %v141
  %338 = vmatprep.subr.bf16.mxu0 0
  %339 = vmatpush1.bf16.msra.mxu0 %v140
  %340 = vmatprep.subr.bf16.mxu0 0
  %341 = vmatpush1.bf16.msra.mxu0 %v139
  %342 = vmatprep.subr.bf16.mxu0 0
  %343 = vmatpush1.bf16.msra.mxu0 %v138
  %344 = vmatprep.subr.bf16.mxu0 0
  %345 = vmatpush1.bf16.msra.mxu0 %v137
  %346 = vmatprep.subr.bf16.mxu0 0
  %347 = vmatpush2.bf16.msra.mxu0 %v152
  %348 = vmatprep.subr.bf16.mxu0 0
  %349 = vmatpush2.bf16.msra.mxu0 %v151
  %350 = vmatprep.subr.bf16.mxu0 0
  %351 = vmatpush2.bf16.msra.mxu0 %v150
  %352 = vmatprep.subr.bf16.mxu0 0
  %353 = vmatpush2.bf16.msra.mxu0 %v149
  %354 = vmatprep.subr.bf16.mxu0 0
  %355 = vmatpush2.bf16.msra.mxu0 %v148
  %356 = vmatprep.subr.bf16.mxu0 0
  %357 = vmatpush2.bf16.msra.mxu0 %v147
  %358 = vmatprep.subr.bf16.mxu0 0
  %359 = vmatpush2.bf16.msra.mxu0 %v146
  %360 = vmatprep.subr.bf16.mxu0 0
  %361 = vmatpush2.bf16.msra.mxu0 %v145
  %362 = vmatprep.mubr.bf16.mxu0 %v327
  %363 = vmatmul.mubr.bf16.gmra.mxu0 %v326
  %v364 = vpop.f32.mrf.mxu0
  %v365 = vadd.f32 0.0, %v364
  %v366 = vpop.f32.mrf.mxu0
  %v367 = vpop.f32.mrf.mxu0
  %v368 = vpop.f32.mrf.mxu0
  %369 = vdwg.mxu0
  %371 = vrot.lane.b32.xlu0 %v365, 96
  %v372 = vpop.permute.xlu0 %371
  %vm374 = vcmask 1048320
  %375 = vst.msk [vmem:[#allocation2] sm:$0xff] %vm374, %v372
  %v376 = vld [vmem:[%s8] ss:$0 sm:$0xff]
  %v377 = vld [vmem:[%s8 + $0x1] ss:$0 sm:$0xff]
  %v378 = vld [vmem:[#allocation2] sm:$0xff]
  %v379 = vadd.f32 %v378, %v376
  %v380 = vmax.f32 %v379, 0.0
  %v381 = vpack.c.bf16 %v380, %v380
  %v382 = vld [vmem:[%s2] sm:$0xf]
  %v383 = vld [vmem:[%s2 + $0x4] sm:$0xf]
  %v384 = vld [vmem:[%s2 + $0x8] sm:$0xf]
  %v385 = vld [vmem:[%s2 + $0xc] sm:$0xf]
  %v386 = vld [vmem:[%s2 + $0x10] sm:$0xf]
  %v387 = vld [vmem:[%s2 + $0x14] sm:$0xf]
  %v388 = vld [vmem:[%s2 + $0x18] sm:$0xf]
  %v389 = vld [vmem:[%s2 + $0x1c] sm:$0xf]
  %v390 = vld [vmem:[%s2 + $0x20] sm:$0xf]
  %v391 = vld [vmem:[%s2 + $0x24] sm:$0xf]
  %v392 = vld [vmem:[%s2 + $0x28] sm:$0xf]
  %v393 = vld [vmem:[%s2 + $0x2c] sm:$0xf]
  %v394 = vld [vmem:[%s2 + $0x30] sm:$0xf]
  %v395 = vld [vmem:[%s2 + $0x34] sm:$0xf]
  %v396 = vld [vmem:[%s2 + $0x38] sm:$0xf]
  %v397 = vld [vmem:[%s2 + $0x3c] sm:$0xf]
  %v414 = vunpack.c.l.b16 %v382
  %v415 = vunpack.c.l.b16 %v383
  %v416 = vunpack.c.l.b16 %v384
  %v417 = vunpack.c.l.b16 %v385
  %v418 = vunpack.c.l.b16 %v386
  %v419 = vunpack.c.l.b16 %v387
  %v420 = vunpack.c.l.b16 %v388
  %v421 = vunpack.c.l.b16 %v389
  %v422 = vunpack.c.l.b16 %v390
  %v423 = vunpack.c.l.b16 %v391
  %v424 = vunpack.c.l.b16 %v392
  %v425 = vunpack.c.l.b16 %v393
  %v426 = vunpack.c.l.b16 %v394
  %v427 = vunpack.c.l.b16 %v395
  %v428 = vunpack.c.l.b16 %v396
  %v429 = vunpack.c.l.b16 %v397
  %v430 = vpack.c.b16 %v415, %v414
  %v431 = vpack.c.b16 %v417, %v416
  %v432 = vpack.c.b16 %v419, %v418
  %v433 = vpack.c.b16 %v421, %v420
  %v434 = vpack.c.b16 %v423, %v422
  %v435 = vpack.c.b16 %v425, %v424
  %v436 = vpack.c.b16 %v427, %v426
  %v437 = vpack.c.b16 %v429, %v428
  %446 = vmatprep.subr.bf16.mxu0 0
  %447 = vmatpush1.bf16.msra.mxu0 %v437
  %448 = vmatprep.subr.bf16.mxu0 0
  %449 = vmatpush1.bf16.msra.mxu0 %v436
  %450 = vmatprep.subr.bf16.mxu0 0
  %451 = vmatpush1.bf16.msra.mxu0 %v435
  %452 = vmatprep.subr.bf16.mxu0 0
  %453 = vmatpush1.bf16.msra.mxu0 %v434
  %454 = vmatprep.subr.bf16.mxu0 0
  %455 = vmatpush1.bf16.msra.mxu0 %v433
  %456 = vmatprep.subr.bf16.mxu0 0
  %457 = vmatpush1.bf16.msra.mxu0 %v432
  %458 = vmatprep.subr.bf16.mxu0 0
  %459 = vmatpush1.bf16.msra.mxu0 %v431
  %460 = vmatprep.subr.bf16.mxu0 0
  %461 = vmatpush1.bf16.msra.mxu0 %v430
  %462 = vmatprep.subr.bf16.mxu0 0
  %463 = vmatpush2.bf16.msra.mxu0 0
  %464 = vmatprep.subr.bf16.mxu0 0
  %465 = vmatpush2.bf16.msra.mxu0 0
  %466 = vmatprep.subr.bf16.mxu0 0
  %467 = vmatpush2.bf16.msra.mxu0 0
  %468 = vmatprep.subr.bf16.mxu0 0
  %469 = vmatpush2.bf16.msra.mxu0 0
  %470 = vmatprep.subr.bf16.mxu0 0
  %471 = vmatpush2.bf16.msra.mxu0 0
  %472 = vmatprep.subr.bf16.mxu0 0
  %473 = vmatpush2.bf16.msra.mxu0 0
  %474 = vmatprep.subr.bf16.mxu0 0
  %475 = vmatpush2.bf16.msra.mxu0 0
  %476 = vmatprep.subr.bf16.mxu0 0
  %477 = vmatpush2.bf16.msra.mxu0 0
  %478 = vmatprep.mubr.bf16.mxu0 0
  %479 = vmatmul.mubr.bf16.gmra.mxu0 %v381
  %v480 = vpop.f32.mrf.mxu0
  %v481 = vadd.f32 %v377, %v480
  %v482 = vpop.f32.mrf.mxu0
  %v483 = vpop.f32.mrf.mxu0
  %v484 = vpop.f32.mrf.mxu0
  %485 = vdwg.mxu0
  %v486 = vmax.f32 %v481, 0.0
  %v487 = vpack.c.bf16 %v486, %v486
  %vm488 = vcmask 519168
  %489 = vst.msk [vmem:[#allocation3] sm:$0xf] %vm488, %v487
  %v490 = vld [vmem:[%s8 + $0x2] ss:$0 sm:$0xff]
  %v491 = vld [vmem:[%s8 + $0x3] ss:$0 sm:$0xff]
  %v492 = vld [vmem:[%s8 + $0x4] ss:$0 sm:$0xff]
  %v493 = vld [vmem:[%s4] sm:$0xf]
  %v494 = vld [vmem:[%s5] sm:$0xf]
  %v495 = vld [vmem:[%s5 + $0x4] sm:$0x3]
  %v498 = vunpack.c.l.b16 %v494
  %v499 = vunpack.c.l.b16 %v495
  %v500 = vpack.c.b16 %v499, %v498
  %vm501 = vcmask 97280
  %v503 = vsel %vm501, %v493, 0
  %vm505 = vcmask 1045504
  %v507 = vsel %vm505, %v500, 0
  %509 = vmatprep.subr.bf16.mxu0 0
  %510 = vmatpush1.bf16.msra.mxu0 0
  %511 = vmatprep.subr.bf16.mxu0 0
  %512 = vmatpush1.bf16.msra.mxu0 0
  %513 = vmatprep.subr.bf16.mxu0 0
  %514 = vmatpush1.bf16.msra.mxu0 0
  %515 = vmatprep.subr.bf16.mxu0 0
  %516 = vmatpush1.bf16.msra.mxu0 0
  %517 = vmatprep.subr.bf16.mxu0 0
  %518 = vmatpush1.bf16.msra.mxu0 0
  %519 = vmatprep.subr.bf16.mxu0 0
  %520 = vmatpush1.bf16.msra.mxu0 0
  %521 = vmatprep.subr.bf16.mxu0 0
  %522 = vmatpush1.bf16.msra.mxu0 0
  %523 = vmatprep.subr.bf16.mxu0 0
  %524 = vmatpush1.bf16.msra.mxu0 %v507
  %525 = vmatprep.subr.bf16.mxu0 0
  %526 = vmatpush2.bf16.msra.mxu0 0
  %527 = vmatprep.subr.bf16.mxu0 0
  %528 = vmatpush2.bf16.msra.mxu0 0
  %529 = vmatprep.subr.bf16.mxu0 0
  %530 = vmatpush2.bf16.msra.mxu0 0
  %531 = vmatprep.subr.bf16.mxu0 0
  %532 = vmatpush2.bf16.msra.mxu0 0
  %533 = vmatprep.subr.bf16.mxu0 0
  %534 = vmatpush2.bf16.msra.mxu0 0
  %535 = vmatprep.subr.bf16.mxu0 0
  %536 = vmatpush2.bf16.msra.mxu0 0
  %537 = vmatprep.subr.bf16.mxu0 0
  %538 = vmatpush2.bf16.msra.mxu0 0
  %539 = vmatprep.subr.bf16.mxu0 0
  %540 = vmatpush2.bf16.msra.mxu0 0
  %541 = vmatprep.mubr.bf16.mxu0 0
  %542 = vmatmul.mubr.bf16.gmra.mxu0 %v503
  %v543 = vpop.f32.mrf.mxu0
  %v544 = vadd.f32 %v490, %v543
  %v545 = vpop.f32.mrf.mxu0
  %v546 = vpop.f32.mrf.mxu0
  %v547 = vpop.f32.mrf.mxu0
  %548 = vdwg.mxu0
  %v549 = vmax.f32 %v544, 0.0
  %v550 = vpack.c.bf16 %v549, %v549
  %v551 = vld [vmem:[%s6] sm:$0xf]
  %v552 = vld [vmem:[%s6 + $0x4] sm:$0xf]
  %v553 = vld [vmem:[%s6 + $0x8] sm:$0xf]
  %v554 = vld [vmem:[%s6 + $0xc] sm:$0xf]
  %v555 = vld [vmem:[%s6 + $0x10] sm:$0xf]
  %v556 = vld [vmem:[%s6 + $0x14] sm:$0xf]
  %v557 = vld [vmem:[%s6 + $0x18] sm:$0xf]
  %v558 = vld [vmem:[%s6 + $0x1c] sm:$0xf]
  %v559 = vld [vmem:[%s6 + $0x20] sm:$0xf]
  %v560 = vld [vmem:[%s6 + $0x24] sm:$0xf]
  %v561 = vld [vmem:[%s6 + $0x28] sm:$0xf]
  %v562 = vld [vmem:[%s6 + $0x2c] sm:$0xf]
  %v563 = vld [vmem:[%s6 + $0x30] sm:$0xf]
  %v564 = vld [vmem:[%s6 + $0x34] sm:$0xf]
  %v565 = vld [vmem:[%s6 + $0x38] sm:$0xf]
  %v566 = vld [vmem:[%s6 + $0x3c] sm:$0xf]
  %v583 = vunpack.c.l.b16 %v551
  %v584 = vunpack.c.l.b16 %v552
  %v585 = vunpack.c.l.b16 %v553
  %v586 = vunpack.c.l.b16 %v554
  %v587 = vunpack.c.l.b16 %v555
  %v588 = vunpack.c.l.b16 %v556
  %v589 = vunpack.c.l.b16 %v557
  %v590 = vunpack.c.l.b16 %v558
  %v591 = vunpack.c.l.b16 %v559
  %v592 = vunpack.c.l.b16 %v560
  %v593 = vunpack.c.l.b16 %v561
  %v594 = vunpack.c.l.b16 %v562
  %v595 = vunpack.c.l.b16 %v563
  %v596 = vunpack.c.l.b16 %v564
  %v597 = vunpack.c.l.b16 %v565
  %v598 = vunpack.c.l.b16 %v566
  %v599 = vpack.c.b16 %v584, %v583
  %v600 = vpack.c.b16 %v586, %v585
  %v601 = vpack.c.b16 %v588, %v587
  %v602 = vpack.c.b16 %v590, %v589
  %v603 = vpack.c.b16 %v592, %v591
  %v604 = vpack.c.b16 %v594, %v593
  %v605 = vpack.c.b16 %v596, %v595
  %v606 = vpack.c.b16 %v598, %v597
  %615 = vmatprep.subr.bf16.mxu0 0
  %616 = vmatpush1.bf16.msra.mxu0 %v606
  %617 = vmatprep.subr.bf16.mxu0 0
  %618 = vmatpush1.bf16.msra.mxu0 %v605
  %619 = vmatprep.subr.bf16.mxu0 0
  %620 = vmatpush1.bf16.msra.mxu0 %v604
  %621 = vmatprep.subr.bf16.mxu0 0
  %622 = vmatpush1.bf16.msra.mxu0 %v603
  %623 = vmatprep.subr.bf16.mxu0 0
  %624 = vmatpush1.bf16.msra.mxu0 %v602
  %625 = vmatprep.subr.bf16.mxu0 0
  %626 = vmatpush1.bf16.msra.mxu0 %v601
  %627 = vmatprep.subr.bf16.mxu0 0
  %628 = vmatpush1.bf16.msra.mxu0 %v600
  %629 = vmatprep.subr.bf16.mxu0 0
  %630 = vmatpush1.bf16.msra.mxu0 %v599
  %631 = vmatprep.subr.bf16.mxu0 0
  %632 = vmatpush2.bf16.msra.mxu0 0
  %633 = vmatprep.subr.bf16.mxu0 0
  %634 = vmatpush2.bf16.msra.mxu0 0
  %635 = vmatprep.subr.bf16.mxu0 0
  %636 = vmatpush2.bf16.msra.mxu0 0
  %637 = vmatprep.subr.bf16.mxu0 0
  %638 = vmatpush2.bf16.msra.mxu0 0
  %639 = vmatprep.subr.bf16.mxu0 0
  %640 = vmatpush2.bf16.msra.mxu0 0
  %641 = vmatprep.subr.bf16.mxu0 0
  %642 = vmatpush2.bf16.msra.mxu0 0
  %643 = vmatprep.subr.bf16.mxu0 0
  %644 = vmatpush2.bf16.msra.mxu0 0
  %645 = vmatprep.subr.bf16.mxu0 0
  %646 = vmatpush2.bf16.msra.mxu0 0
  %647 = vmatprep.mubr.bf16.mxu0 0
  %648 = vmatmul.mubr.bf16.gmra.mxu0 %v550
  %v649 = vpop.f32.mrf.mxu0
  %v650 = vadd.f32 %v491, %v649
  %v651 = vpop.f32.mrf.mxu0
  %v652 = vpop.f32.mrf.mxu0
  %v653 = vpop.f32.mrf.mxu0
  %654 = vdwg.mxu0
  %v655 = vmax.f32 %v650, 0.0
  %v656 = vpack.c.bf16 %v655, %v655
  %s657 = scalar_lea.vmem %s6, 64
  %v658 = vld [vmem:[%s657] sm:$0xf]
  %v659 = vld [vmem:[%s657 + $0x4] sm:$0xf]
  %v660 = vld [vmem:[%s657 + $0x8] sm:$0xf]
  %v661 = vld [vmem:[%s657 + $0xc] sm:$0xf]
  %v662 = vld [vmem:[%s657 + $0x10] sm:$0xf]
  %v663 = vld [vmem:[%s657 + $0x14] sm:$0xf]
  %v664 = vld [vmem:[%s657 + $0x18] sm:$0xf]
  %v665 = vld [vmem:[%s657 + $0x1c] sm:$0xf]
  %v666 = vld [vmem:[%s657 + $0x20] sm:$0xf]
  %v667 = vld [vmem:[%s657 + $0x24] sm:$0xf]
  %v668 = vld [vmem:[%s657 + $0x28] sm:$0xf]
  %v669 = vld [vmem:[%s657 + $0x2c] sm:$0xf]
  %v670 = vld [vmem:[%s657 + $0x30] sm:$0xf]
  %v671 = vld [vmem:[%s657 + $0x34] sm:$0xf]
  %v672 = vld [vmem:[%s657 + $0x38] sm:$0xf]
  %v673 = vld [vmem:[%s657 + $0x3c] sm:$0xf]
  %v690 = vunpack.c.l.b16 %v658
  %v691 = vunpack.c.l.b16 %v659
  %v692 = vunpack.c.l.b16 %v660
  %v693 = vunpack.c.l.b16 %v661
  %v694 = vunpack.c.l.b16 %v662
  %v695 = vunpack.c.l.b16 %v663
  %v696 = vunpack.c.l.b16 %v664
  %v697 = vunpack.c.l.b16 %v665
  %v698 = vunpack.c.l.b16 %v666
  %v699 = vunpack.c.l.b16 %v667
  %v700 = vunpack.c.l.b16 %v668
  %v701 = vunpack.c.l.b16 %v669
  %v702 = vunpack.c.l.b16 %v670
  %v703 = vunpack.c.l.b16 %v671
  %v704 = vunpack.c.l.b16 %v672
  %v705 = vunpack.c.l.b16 %v673
  %v706 = vpack.c.b16 %v691, %v690
  %v707 = vpack.c.b16 %v693, %v692
  %v708 = vpack.c.b16 %v695, %v694
  %v709 = vpack.c.b16 %v697, %v696
  %v710 = vpack.c.b16 %v699, %v698
  %v711 = vpack.c.b16 %v701, %v700
  %v712 = vpack.c.b16 %v703, %v702
  %v713 = vpack.c.b16 %v705, %v704
  %722 = vmatprep.subr.bf16.mxu0 0
  %723 = vmatpush1.bf16.msra.mxu0 %v713
  %724 = vmatprep.subr.bf16.mxu0 0
  %725 = vmatpush1.bf16.msra.mxu0 %v712
  %726 = vmatprep.subr.bf16.mxu0 0
  %727 = vmatpush1.bf16.msra.mxu0 %v711
  %728 = vmatprep.subr.bf16.mxu0 0
  %729 = vmatpush1.bf16.msra.mxu0 %v710
  %730 = vmatprep.subr.bf16.mxu0 0
  %731 = vmatpush1.bf16.msra.mxu0 %v709
  %732 = vmatprep.subr.bf16.mxu0 0
  %733 = vmatpush1.bf16.msra.mxu0 %v708
  %734 = vmatprep.subr.bf16.mxu0 0
  %735 = vmatpush1.bf16.msra.mxu0 %v707
  %736 = vmatprep.subr.bf16.mxu0 0
  %737 = vmatpush1.bf16.msra.mxu0 %v706
  %738 = vmatprep.subr.bf16.mxu0 0
  %739 = vmatpush2.bf16.msra.mxu0 0
  %740 = vmatprep.subr.bf16.mxu0 0
  %741 = vmatpush2.bf16.msra.mxu0 0
  %742 = vmatprep.subr.bf16.mxu0 0
  %743 = vmatpush2.bf16.msra.mxu0 0
  %744 = vmatprep.subr.bf16.mxu0 0
  %745 = vmatpush2.bf16.msra.mxu0 0
  %746 = vmatprep.subr.bf16.mxu0 0
  %747 = vmatpush2.bf16.msra.mxu0 0
  %748 = vmatprep.subr.bf16.mxu0 0
  %749 = vmatpush2.bf16.msra.mxu0 0
  %750 = vmatprep.subr.bf16.mxu0 0
  %751 = vmatpush2.bf16.msra.mxu0 0
  %752 = vmatprep.subr.bf16.mxu0 0
  %753 = vmatpush2.bf16.msra.mxu0 0
  %754 = vmatprep.mubr.bf16.mxu0 0
  %755 = vmatmul.mubr.bf16.gmra.mxu0 %v656
  %v756 = vpop.f32.mrf.mxu0
  %v757 = vadd.f32 %v492, %v756
  %v758 = vpop.f32.mrf.mxu0
  %v759 = vpop.f32.mrf.mxu0
  %v760 = vpop.f32.mrf.mxu0
  %761 = vdwg.mxu0
  %v762 = vmax.f32 %v757, 0.0
  %s763 = scalar_lea.vmem %s8, 5
  %v764 = vld [vmem:[%s763] ss:$8 sm:$0x3]
  %v765 = vpack.c.bf16 %v762, %v762
  %v766 = vld [vmem:[%s7] sm:$0xff]
  %v767 = vld [vmem:[%s7 + $0x8] sm:$0xff]
  %v768 = vld [vmem:[%s7 + $0x10] sm:$0xff]
  %v769 = vld [vmem:[%s7 + $0x18] sm:$0xff]
  %v770 = vld [vmem:[%s7 + $0x20] sm:$0xff]
  %v771 = vld [vmem:[%s7 + $0x28] sm:$0xff]
  %v772 = vld [vmem:[%s7 + $0x30] sm:$0xff]
  %v773 = vld [vmem:[%s7 + $0x38] sm:$0xff]
  %v774 = vld [vmem:[%s7 + $0x40] sm:$0xff]
  %v775 = vld [vmem:[%s7 + $0x48] sm:$0xff]
  %v776 = vld [vmem:[%s7 + $0x50] sm:$0xff]
  %v777 = vld [vmem:[%s7 + $0x58] sm:$0xff]
  %v778 = vld [vmem:[%s7 + $0x60] sm:$0xff]
  %v779 = vld [vmem:[%s7 + $0x68] sm:$0xff]
  %v780 = vld [vmem:[%s7 + $0x70] sm:$0xff]
  %v781 = vld [vmem:[%s7 + $0x78] sm:$0xff]
  %v783 = vlaneseq
  %v784 = vshrl.u32 %v783, 7
  %v785 = vsub.s32 0, %v784
  %v786 = vrot.slane %v764, %v785
  %v787 = vlaneseq
  %v788 = vshrl.u32 %v787, 7
  %v789 = vsub.s32 1, %v788
  %v790 = vrot.slane %v764, %v789
  %v809 = vunpack.c.l.b16 %v766
  %v810 = vunpack.c.h.b16 %v766
  %v811 = vunpack.c.l.b16 %v767
  %v812 = vunpack.c.h.b16 %v767
  %v813 = vunpack.c.l.b16 %v768
  %v814 = vunpack.c.h.b16 %v768
  %v815 = vunpack.c.l.b16 %v769
  %v816 = vunpack.c.h.b16 %v769
  %v817 = vunpack.c.l.b16 %v770
  %v818 = vunpack.c.h.b16 %v770
  %v819 = vunpack.c.l.b16 %v771
  %v820 = vunpack.c.h.b16 %v771
  %v821 = vunpack.c.l.b16 %v772
  %v822 = vunpack.c.h.b16 %v772
  %v823 = vunpack.c.l.b16 %v773
  %v824 = vunpack.c.h.b16 %v773
  %v825 = vunpack.c.l.b16 %v774
  %v826 = vunpack.c.h.b16 %v774
  %v827 = vunpack.c.l.b16 %v775
  %v828 = vunpack.c.h.b16 %v775
  %v829 = vunpack.c.l.b16 %v776
  %v830 = vunpack.c.h.b16 %v776
  %v831 = vunpack.c.l.b16 %v777
  %v832 = vunpack.c.h.b16 %v777
  %v833 = vunpack.c.l.b16 %v778
  %v834 = vunpack.c.h.b16 %v778
  %v835 = vunpack.c.l.b16 %v779
  %v836 = vunpack.c.h.b16 %v779
  %v837 = vunpack.c.l.b16 %v780
  %v838 = vunpack.c.h.b16 %v780
  %v839 = vunpack.c.l.b16 %v781
  %v840 = vunpack.c.h.b16 %v781
  %v841 = vpack.c.b16 %v811, %v809
  %v842 = vpack.c.b16 %v812, %v810
  %v843 = vpack.c.b16 %v815, %v813
  %v844 = vpack.c.b16 %v816, %v814
  %v845 = vpack.c.b16 %v819, %v817
  %v846 = vpack.c.b16 %v820, %v818
  %v847 = vpack.c.b16 %v823, %v821
  %v848 = vpack.c.b16 %v824, %v822
  %v849 = vpack.c.b16 %v827, %v825
  %v850 = vpack.c.b16 %v828, %v826
  %v851 = vpack.c.b16 %v831, %v829
  %v852 = vpack.c.b16 %v832, %v830
  %v853 = vpack.c.b16 %v835, %v833
  %v854 = vpack.c.b16 %v836, %v834
  %v855 = vpack.c.b16 %v839, %v837
  %v856 = vpack.c.b16 %v840, %v838
  %873 = vmatprep.subr.bf16.mxu0 %v856
  %874 = vmatpush1.bf16.msra.mxu0 %v855
  %875 = vmatprep.subr.bf16.mxu0 %v854
  %876 = vmatpush1.bf16.msra.mxu0 %v853
  %877 = vmatprep.subr.bf16.mxu0 %v852
  %878 = vmatpush1.bf16.msra.mxu0 %v851
  %879 = vmatprep.subr.bf16.mxu0 %v850
  %880 = vmatpush1.bf16.msra.mxu0 %v849
  %881 = vmatprep.subr.bf16.mxu0 %v848
  %882 = vmatpush1.bf16.msra.mxu0 %v847
  %883 = vmatprep.subr.bf16.mxu0 %v846
  %884 = vmatpush1.bf16.msra.mxu0 %v845
  %885 = vmatprep.subr.bf16.mxu0 %v844
  %886 = vmatpush1.bf16.msra.mxu0 %v843
  %887 = vmatprep.subr.bf16.mxu0 %v842
  %888 = vmatpush1.bf16.msra.mxu0 %v841
  %889 = vmatprep.subr.bf16.mxu0 0
  %890 = vmatpush2.bf16.msra.mxu0 0
  %891 = vmatprep.subr.bf16.mxu0 0
  %892 = vmatpush2.bf16.msra.mxu0 0
  %893 = vmatprep.subr.bf16.mxu0 0
  %894 = vmatpush2.bf16.msra.mxu0 0
  %895 = vmatprep.subr.bf16.mxu0 0
  %896 = vmatpush2.bf16.msra.mxu0 0
  %897 = vmatprep.subr.bf16.mxu0 0
  %898 = vmatpush2.bf16.msra.mxu0 0
  %899 = vmatprep.subr.bf16.mxu0 0
  %900 = vmatpush2.bf16.msra.mxu0 0
  %901 = vmatprep.subr.bf16.mxu0 0
  %902 = vmatpush2.bf16.msra.mxu0 0
  %903 = vmatprep.subr.bf16.mxu0 0
  %904 = vmatpush2.bf16.msra.mxu0 0
  %905 = vmatprep.mubr.bf16.mxu0 0
  %906 = vmatmul.mubr.bf16.gmra.mxu0 %v765
  %v907 = vpop.f32.mrf.mxu0
  %v908 = vadd.f32 %v786, %v907
  %v909 = vpop.f32.mrf.mxu0
  %v910 = vadd.f32 %v790, %v909
  %v911 = vpop.f32.mrf.mxu0
  %v912 = vpop.f32.mrf.mxu0
  %913 = vdwg.mxu0
  %914 = vst [vmem:[#allocation4] sm:$0xff] %v908
  %915 = vst [vmem:[#allocation4 + $0x8] sm:$0xff] %v910
  %v916 = vld [vmem:[#allocation4] sm:$0xff]
  %v917 = vld [vmem:[#allocation4 + $0x8] sm:$0xff]
  %v918 = vld [vmem:[#allocation3] sm:$0xf]
  %s919 = smul.u32 0, 2
  %s920 = smul.addr %s919, 4
  %s921 = scalar_lea.vmem %s3, %s920
  %v922 = vld [vmem:[%s921] sm:$0xff]
  %v923 = vld [vmem:[%s921 + $0x8] sm:$0xff]
  %v924 = vld [vmem:[%s921 + $0x10] sm:$0xff]
  %v925 = vld [vmem:[%s921 + $0x18] sm:$0xff]
  %v926 = vld [vmem:[%s921 + $0x20] sm:$0xff]
  %v927 = vld [vmem:[%s921 + $0x28] sm:$0xff]
  %v928 = vld [vmem:[%s921 + $0x30] sm:$0xff]
  %v929 = vld [vmem:[%s921 + $0x38] sm:$0xff]
  %v938 = vunpack.c.l.b16 %v922
  %v939 = vunpack.c.h.b16 %v922
  %v940 = vunpack.c.l.b16 %v923
  %v941 = vunpack.c.h.b16 %v923
  %v942 = vunpack.c.l.b16 %v924
  %v943 = vunpack.c.h.b16 %v924
  %v944 = vunpack.c.l.b16 %v925
  %v945 = vunpack.c.h.b16 %v925
  %v946 = vunpack.c.l.b16 %v926
  %v947 = vunpack.c.h.b16 %v926
  %v948 = vunpack.c.l.b16 %v927
  %v949 = vunpack.c.h.b16 %v927
  %v950 = vunpack.c.l.b16 %v928
  %v951 = vunpack.c.h.b16 %v928
  %v952 = vunpack.c.l.b16 %v929
  %v953 = vunpack.c.h.b16 %v929
  %v954 = vpack.c.b16 %v940, %v938
  %v955 = vpack.c.b16 %v941, %v939
  %v956 = vpack.c.b16 %v944, %v942
  %v957 = vpack.c.b16 %v945, %v943
  %v958 = vpack.c.b16 %v948, %v946
  %v959 = vpack.c.b16 %v949, %v947
  %v960 = vpack.c.b16 %v952, %v950
  %v961 = vpack.c.b16 %v953, %v951
  %vm970 = vcmask 523264
  %v972 = vsel %vm970, %v918, 0
  %974 = vmatprep.subr.bf16.mxu0 0
  %975 = vmatpush1.bf16.msra.mxu0 0
  %976 = vmatprep.subr.bf16.mxu0 0
  %977 = vmatpush1.bf16.msra.mxu0 0
  %978 = vmatprep.subr.bf16.mxu0 0
  %979 = vmatpush1.bf16.msra.mxu0 0
  %980 = vmatprep.subr.bf16.mxu0 0
  %981 = vmatpush1.bf16.msra.mxu0 0
  %982 = vmatprep.subr.bf16.mxu0 %v961
  %983 = vmatpush1.bf16.msra.mxu0 %v960
  %984 = vmatprep.subr.bf16.mxu0 %v959
  %985 = vmatpush1.bf16.msra.mxu0 %v958
  %986 = vmatprep.subr.bf16.mxu0 %v957
  %987 = vmatpush1.bf16.msra.mxu0 %v956
  %988 = vmatprep.subr.bf16.mxu0 %v955
  %989 = vmatpush1.bf16.msra.mxu0 %v954
  %990 = vmatprep.subr.bf16.mxu0 0
  %991 = vmatpush2.bf16.msra.mxu0 0
  %992 = vmatprep.subr.bf16.mxu0 0
  %993 = vmatpush2.bf16.msra.mxu0 0
  %994 = vmatprep.subr.bf16.mxu0 0
  %995 = vmatpush2.bf16.msra.mxu0 0
  %996 = vmatprep.subr.bf16.mxu0 0
  %997 = vmatpush2.bf16.msra.mxu0 0
  %998 = vmatprep.subr.bf16.mxu0 0
  %999 = vmatpush2.bf16.msra.mxu0 0
  %1000 = vmatprep.subr.bf16.mxu0 0
  %1001 = vmatpush2.bf16.msra.mxu0 0
  %1002 = vmatprep.subr.bf16.mxu0 0
  %1003 = vmatpush2.bf16.msra.mxu0 0
  %1004 = vmatprep.subr.bf16.mxu0 0
  %1005 = vmatpush2.bf16.msra.mxu0 0
  %1006 = vmatprep.mubr.bf16.mxu0 0
  %1007 = vmatmul.mubr.bf16.gmra.mxu0 %v972
  %v1008 = vpop.f32.mrf.mxu0
  %v1009 = vadd.f32 0.0, %v1008
  %v1010 = vpop.f32.mrf.mxu0
  %v1011 = vadd.f32 0.0, %v1010
  %v1012 = vpop.f32.mrf.mxu0
  %v1013 = vpop.f32.mrf.mxu0
  %1014 = vdwg.mxu0
  %v1015 = vadd.f32 %v916, %v1009
  %v1016 = vadd.f32 %v917, %v1011
  %1017 = vst [vmem:[#allocation4] sm:$0xff] %v1015
  %1018 = vst [vmem:[#allocation4 + $0x8] sm:$0xff] %v1016
  %v1019 = vld [vmem:[#allocation4] sm:$0xff]
  %v1020 = vld [vmem:[#allocation4 + $0x8] sm:$0xff]
  %v1021 = vmax.f32 %v1019, 0.0
  %v1022 = vmax.f32 %v1020, 0.0
  %1023 = vst [vmem:[%s9] sm:$0xff] %v1021
  %1024 = vst [vmem:[%s9 + $0x8] sm:$0xff] %v1022
  // Predicated region
  $region38: #{mix_observation_nn_forward.1} parent=0 // pred_check
    _
  $region39: #{mix_observation_nn_forward.1} parent=0 // pred_check_branch
    %1026 = sbr.rel (0) target = $region41
  $region40: #{mix_observation_nn_forward.1} parent=0 // pred_region
    _
  $region41: #{mix_observation_nn_forward.1} parent=0 // pred_fallthru
    _
  // Predicated region
  $region42: #{mix_observation_nn_forward.1} parent=0 // pred_check
    _
  $region43: #{mix_observation_nn_forward.1} parent=0 // pred_check_branch
    %1028 = sbr.rel (0) target = $region45
  $region44: #{mix_observation_nn_forward.1} parent=0 // pred_region
    _
  $region45: #{mix_observation_nn_forward.1} parent=0 // pred_fallthru
    _

</llo_original>
